<compile_context>
chip_gen: v7x
topology: tpu7x:2x2x1
jax: 0.10.0
libtpu: 0.0.40
codegen_flags: <defaults>
</compile_context>

<pallas_src>
import jax
import jax.numpy as jnp
from jax.experimental import pallas as pl
from jax.experimental.pallas import tpu as pltpu

SUBLANE = 8
LANE = 128
# Prefer 1024 lanes (8 vregs wide); fall back through other 128-multiples.
_PREFERRED_LANE_WIDTHS = (1024, 2048, 4096, 512, 256, 128)
_DEFAULT_MIN_PALLAS_BYTES = 1 << 20  # below ~1 MiB, fused XLA multiply wins


def _generation_budget():
    """Return (per-buffer block bytes, vmem_limit_bytes) per TPU generation."""
    try:
        kind = jax.devices()[0].device_kind.lower()
    except Exception:
        kind = ""
    if "v5" in kind:
        # v5e: 16 MiB scoped-VMEM default -> ~3 MiB blocks (4 pipelined bufs ~ 12 MiB).
        return 3 * 1024 * 1024, 16 * 1024 * 1024
    if "v7" in kind:
        # v7x: 64 MiB physical / 32 MiB scoped per TC -> 4 MiB blocks (~16 MiB total).
        return 4 * 1024 * 1024, 32 * 1024 * 1024
    # v6e (or unknown): 128 MiB physical -> 6 MiB blocks (~24 MiB pipelined) under 32 MiB.
    return 6 * 1024 * 1024, 32 * 1024 * 1024


def gain_kernel(gain_ref, x_ref, o_ref):
    # gain_ref: (1, 1) fp32 scalar in SMEM; x_ref / o_ref: (tm, W) lane-dense
    # VMEM tiles.  Multiply promotes to fp32, result cast back to x dtype.
    g = gain_ref[0, 0]
    o_ref[...] = (x_ref[...] * g).astype(o_ref.dtype)


def _run_gain_2d(x2d, gain_f32, *, donate_x=False):
    """Run the scalar-gain kernel over a lane-dense 2-D slab."""
    rows, width = x2d.shape
    itemsize = jnp.dtype(x2d.dtype).itemsize
    block_bytes, vmem_limit = _generation_budget()

    # Sub-32-bit dtypes pack 2/4 rows per sublane; round block rows to the
    # packed sublane count to avoid masked/partial vector stores at tile edges.
    pack = max(SUBLANE, SUBLANE * (4 // max(1, itemsize)))

    if rows <= pack:
        # Block row dim equal to the full array dim is always legal.
        tm = rows
    else:
        tm = block_bytes // (width * itemsize)
        tm = max(pack, (tm // pack) * pack)          # multiple of packed sublanes
        tm = min(tm, (rows // pack) * pack)          # don't exceed rows
        # Guarantee >= 2 grid steps so both v7x TensorCores stream
        # (dimension_semantics=("parallel",) shards the grid across TCs).
        if pl.cdiv(rows, tm) == 1 and rows >= 2 * pack:
            half = (rows + 1) // 2
            tm = min(tm, ((half + pack - 1) // pack) * pack)

    grid = (pl.cdiv(rows, tm),)
    g = jnp.reshape(gain_f32, (1, 1))                # SMEM-friendly (1,1) fp32

    kwargs = {}
    if donate_x:
        # Alias x -> out when the caller donates x (avoids a second HBM buffer).
        kwargs["input_output_aliases"] = {1: 0}

    return pl.pallas_call(
        gain_kernel,
        out_shape=jax.ShapeDtypeStruct((rows, width), x2d.dtype),
        grid=grid,
        in_specs=[
            pl.BlockSpec(memory_space=pltpu.MemorySpace.SMEM),   # gain scalar
            pl.BlockSpec((tm, width), lambda i: (i, 0)),         # x tile (full lane extent)
        ],
        out_specs=pl.BlockSpec((tm, width), lambda i: (i, 0)),
        compiler_params=pltpu.CompilerParams(
            dimension_semantics=("parallel",),
            vmem_limit_bytes=vmem_limit,
        ),
        **kwargs,
    )(g, x2d)


def gain_forward(x, gain, *, min_pallas_bytes=_DEFAULT_MIN_PALLAS_BYTES,
                 donate_x=False):
    """out = x * gain (scalar fp32 gain), matching Gain.forward."""
    orig_shape = x.shape
    total = x.size
    if total == 0:
        return x
    gain_f32 = jnp.asarray(gain, dtype=jnp.float32)
    nbytes = total * jnp.dtype(x.dtype).itemsize

    # Small tensors: a standalone pallas_call is a fusion barrier with fixed
    # dispatch overhead; plain XLA multiply (fusable into producers) wins.
    if nbytes < min_pallas_bytes:
        return (x * gain_f32).astype(x.dtype)

    # Padding-free lane-dense path: widest preferred lane width dividing the
    # element count; reshape to (rows, W) is metadata-only.
    width = None
    for w in _PREFERRED_LANE_WIDTHS:
        if total % w == 0:
            width = w
            break

    if width is None:
        # Ragged (total not a multiple of 128): pad + kernel + slice would cost
        # ~3x the HBM traffic of the optimal 1 read + 1 write, so let XLA do it.
        return (x * gain_f32).astype(x.dtype)

    x2d = jnp.reshape(x, (total // width, width))
    out2d = _run_gain_2d(x2d, gain_f32, donate_x=donate_x)
    return out2d.reshape(orig_shape)


if __name__ == "__main__":
    key = jax.random.PRNGKey(0)
    x = jax.random.normal(key, (2, 4, 16, 16), dtype=jnp.float32)  # NCHW, like PyTorch

    # Deterministic parameter init, matching nn.Parameter(torch.tensor(0.0)).
    gain = jnp.array(0.0, dtype=jnp.float32)

    # Force the Pallas path (small demo shape would otherwise take the XLA gate).
    out = gain_forward(x, gain, min_pallas_bytes=0)
    jax.block_until_ready(out)
    assert out.shape == x.shape and out.dtype == x.dtype
    assert jnp.allclose(out, x * gain)

    # Nonzero gain: make sure the kernel actually multiplies.
    gain2 = jnp.array(1.5, dtype=jnp.float32)
    out2 = gain_forward(x, gain2, min_pallas_bytes=0)
    jax.block_until_ready(out2)
    assert jnp.allclose(out2, x * 1.5, atol=1e-6)

    # Multi-row slab: exercises the >=2-grid-step (megacore) path.
    xm = jax.random.normal(jax.random.PRNGKey(2), (2, 8, 32, 32), dtype=jnp.float32)
    outm = gain_forward(xm, gain2, min_pallas_bytes=0)
    jax.block_until_ready(outm)
    assert jnp.allclose(outm, xm * 1.5, atol=1e-6)

    # bf16 input: gain stays fp32 inside the kernel, result cast back to bf16.
    xb = x.astype(jnp.bfloat16)
    outb = gain_forward(xb, gain2, min_pallas_bytes=0)
    jax.block_until_ready(outb)
    assert outb.dtype == jnp.bfloat16
    assert jnp.allclose(
        outb.astype(jnp.float32),
        (xb.astype(jnp.float32) * 1.5).astype(jnp.bfloat16).astype(jnp.float32))

    # Ragged total (not a multiple of 128) uses the plain-XLA fallback.
    xr = jax.random.normal(jax.random.PRNGKey(1), (3, 5, 7), dtype=jnp.float32)
    outr = gain_forward(xr, gain2, min_pallas_bytes=0)
    jax.block_until_ready(outr)
    assert outr.shape == xr.shape
    assert jnp.allclose(outr, xr * 1.5, atol=1e-6)

    # Default gate: tiny tensors skip the kernel entirely (still correct).
    outg = gain_forward(x, gain2)
    jax.block_until_ready(outg)
    assert jnp.allclose(outg, x * 1.5, atol=1e-6)

    print("KERNEL_OK")
</pallas_src>

<mosaic_0001>
module attributes {stable_mosaic.version = 11 : i64} {
  func.func @gain_kernel(%arg0: i32, %arg1: memref<1x1xf32, #tpu.memory_space<smem>>, %arg2: memref<2x1024xf32, #tpu.memory_space<vmem>>, %arg3: memref<2x1024xf32, #tpu.memory_space<vmem>>) attributes {dimension_semantics = [#tpu.dimension_semantics<parallel>], iteration_bounds = array<i64: 1>, scalar_prefetch = 0 : i64, scratch_operands = 0 : i64, tpu.core_type = #tpu.core_type<tc>, window_params = [{transform_indices = @transform_0, window_bounds = array<i64: 1, 1>}, {transform_indices = @transform_1, window_bounds = array<i64: 2, 1024>}, {transform_indices = @transform_2, window_bounds = array<i64: 2, 1024>}]} {
    %c0 = arith.constant 0 : index
    %c0_0 = arith.constant 0 : index
    %0 = memref.load %arg1[%c0, %c0_0] : memref<1x1xf32, #tpu.memory_space<smem>>
    %c0_1 = arith.constant 0 : index
    %c0_2 = arith.constant 0 : index
    %1 = vector.load %arg2[%c0_1, %c0_2] : memref<2x1024xf32, #tpu.memory_space<vmem>>, vector<2x1024xf32>
    %2 = vector.broadcast %0 : f32 to vector<2x1024xf32>
    %3 = arith.mulf %1, %2 : vector<2x1024xf32>
    %c0_3 = arith.constant 0 : index
    %c0_4 = arith.constant 0 : index
    %4 = vector.load %arg3[%c0_3, %c0_4] : memref<2x1024xf32, #tpu.memory_space<vmem>>, vector<2x1024xf32>
    tpu.vector_store %arg3[%c0_3, %c0_4], %3 {strides = array<i32>} : memref<2x1024xf32, #tpu.memory_space<vmem>>, vector<2x1024xf32>,
    return
  }
  func.func @transform_0(%arg0: i32) -> (i32, i32) {
    %c0_i32 = arith.constant 0 : i32
    %c0_i32_0 = arith.constant 0 : i32
    %c0_i32_1 = arith.constant 0 : i32
    return %c0_i32, %c0_i32_0 : i32, i32
  }
  func.func @transform_1(%arg0: i32) -> (i32, i32) {
    %c0_i32 = arith.constant 0 : i32
    %c0_i32_0 = arith.constant 0 : i32
    return %arg0, %c0_i32 : i32, i32
  }
  func.func @transform_2(%arg0: i32) -> (i32, i32) {
    %c0_i32 = arith.constant 0 : i32
    %c0_i32_0 = arith.constant 0 : i32
    return %arg0, %c0_i32 : i32, i32
  }
}

</mosaic_0001>

<llo_original>
// kernel: tpu_custom_call.1
$region0: #{tpu_custom_call.1}
  #allocation0 [shape = 'u32[]', space=smem, size = 0x4, offset = 0x4, fixed_abs, tag = 'smem constant byte address 0x4 - core index']
  #allocation1 [shape = 'u32[144,128]{1,0:T(1,128)}', space=vmem, size = 0x12000, scoped, tag = 'internal scratch']
  #allocation2 [shape = 'f32[1,1]{1,0:T(1,128)S(6)}', space=smem, size = 0x200, scoped, tag = 'scoped memory for tpu_custom_call.1']
  %s0 = inlined_call_operand.<no memory space> [shape: f32[1,1], index: 0, kind: input, shape index: {}]
  %s1 = inlined_call_operand.hbm [shape: f32[2,1024], index: 1, kind: input, shape index: {}]
  %s2 = inlined_call_operand.hbm [shape: f32[2,1024], index: 2, kind: output, shape index: {}]
  %s3 = sld [smem:[#allocation0]]
  $region22: #{tpu_custom_call.1} parent=0
    _
  %s5 = ssub.s32 1, %s3
  %s6 = scalar_select 0, %s5, %s3
  %7 = sst [smem:[#allocation2]] %s0
  $region1: #{tpu_custom_call.1} parent=0
    #allocation3 [shape = 'u8[8192]{0}', space=vmem, size = 0x2000, scoped, tag = 'input window, operand 1, single buffered']
    #allocation4 [shape = 's32[1]{0}', space=sflag, size = 0x4, scoped, tag = 'scoped memory for tpu_custom_call.1']
    #allocation5 [shape = 's32[1]{0}', space=sflag, size = 0x4, scoped, tag = 'scoped memory for tpu_custom_call.1']
    #allocation6 [shape = 'u8[8192]{0}', space=vmem, size = 0x2000, scoped, tag = 'output window, operand 0, single buffered']
    %8 = vsyncpa [#allocation4], 0
    %9 = vsyncpa [#allocation5], 0
    // Predicated region
    $region2: #{tpu_custom_call.1} parent=1 // pred_check
      _
    $region3: #{tpu_custom_call.1} parent=1 // pred_check_branch
      %11 = sbr.rel (0) target = $region5
    $region4: #{tpu_custom_call.1} parent=1 // pred_region
      _
    $region5: #{tpu_custom_call.1} parent=1 // pred_fallthru
      _
    // Predicated region
    $region6: #{tpu_custom_call.1} parent=1 // pred_check
      _
    $region7: #{tpu_custom_call.1} parent=1 // pred_check_branch
      %13 = sbr.rel (0) target = $region9
    $region8: #{tpu_custom_call.1} parent=1 // pred_region
      %s15 = ssub.s32 256, 256
      %16 = vsyncadd [#allocation4], %s15
      %s18 = sshll.u32 [#allocation3], 4
      %s19 = int_to_ptr.vmem [resolvable:$true] %s18
      %21 = dma.hbm_to_vmem [thread:$0]  %s1, 256, %s19, [#allocation4]
    $region9: #{tpu_custom_call.1} parent=1 // pred_fallthru
      _
    // Predicated region
    $region10: #{tpu_custom_call.1} parent=1 // pred_check
      _
    $region11: #{tpu_custom_call.1} parent=1 // pred_check_branch
      %23 = sbr.rel (0) target = $region13
    $region12: #{tpu_custom_call.1} parent=1 // pred_region
      %24 = dma.done [#allocation4], 256
    $region13: #{tpu_custom_call.1} parent=1 // pred_fallthru
      _
    %s25 = sld [smem:[#allocation2]]
    %v26 = vld [vmem:[#allocation3] sm:$0xff]
    %v27 = vld [vmem:[#allocation3 + $0x8] sm:$0xff]
    %v28 = vstv %s25
    %v29 = vmul.f32 %v26, %v28
    %v30 = vmul.f32 %v27, %v28
    %31 = vst [vmem:[#allocation6] sm:$0xff] %v29
    %32 = vst [vmem:[#allocation6 + $0x8] sm:$0xff] %v30
    // Predicated region
    $region14: #{tpu_custom_call.1} parent=1 // pred_check
      _
    $region15: #{tpu_custom_call.1} parent=1 // pred_check_branch
      %34 = sbr.rel (0) target = $region17
    $region16: #{tpu_custom_call.1} parent=1 // pred_region
      %s36 = ssub.s32 256, 256
      %37 = vsyncadd [#allocation5], %s36
      %s39 = sshll.u32 [#allocation6], 4
      %s40 = int_to_ptr.vmem [resolvable:$true] %s39
      %42 = dma.vmem_to_hbm [thread:$0]  %s40, 256, %s2, [#allocation5]
    $region17: #{tpu_custom_call.1} parent=1 // pred_fallthru
      _
    // Predicated region
    $region18: #{tpu_custom_call.1} parent=1 // pred_check
      _
    $region19: #{tpu_custom_call.1} parent=1 // pred_check_branch
      %44 = sbr.rel (0) target = $region21
    $region20: #{tpu_custom_call.1} parent=1 // pred_region
      %45 = dma.done [#allocation5], 256
    $region21: #{tpu_custom_call.1} parent=1 // pred_fallthru
      _
    %46 = vsyncpa [#allocation4], 1
    %47 = vsyncpa [#allocation5], 1

</llo_original>
